<compile_context>
chip_gen: v6e
topology: v6e:2x2x1
jax: 0.10.0
libtpu: 0.0.40
codegen_flags: <defaults>
</compile_context>

<pallas_src>
import jax
import jax.numpy as jnp
from jax.experimental import pallas as pl
from jax.experimental.pallas import tpu as pltpu


def epsilon_net_kernel(inp_ref, w1_ref, b1_ref, w2_ref, b2_ref, out_ref):
    # inp_ref: (2*DIM+1, TILE_B)  feature-major, batch on the lane axis
    # w1_ref : (H, 2*DIM+1)       b1_ref: (H, 1)
    # w2_ref : (DIM, H)           b2_ref: (DIM, 1)
    # out_ref: (DIM, TILE_B)
    # Layer 1: one MXU dot covers theta, x AND the t column (17th feature).
    h = jnp.dot(w1_ref[...], inp_ref[...], preferred_element_type=jnp.float32)
    h = jnp.maximum(h + b1_ref[...], 0.0)                      # bias + ReLU (VPU)
    # Layer 2.
    y = jnp.dot(w2_ref[...], h, preferred_element_type=jnp.float32) + b2_ref[...]
    out_ref[...] = jnp.tanh(y)                                 # Tanh (EUP)


def _choose_tile_b(B):
    """Lane-dense batch tile: multiple of 128, >=2 grid steps for large B
    (so v7x can use both TensorCores), capped to stay well inside VMEM."""
    if B <= 128:
        return B                              # single full-extent block
    half = -(-B // 2)                         # cdiv(B, 2)
    tile = -(-half // 128) * 128              # round up to a multiple of 128
    return min(tile, 4096)


def epsilon_net_forward(theta, x, t, params):
    """y = tanh(relu(cat(theta, x, t) @ W1.T + b1) @ W2.T + b2).

    Weights are in the PyTorch nn.Linear layout (out_features, in_features).
    """
    w1, b1, w2, b2 = params
    B, DIM = theta.shape
    H, F_in = w1.shape                         # H = 5*DIM, F_in = 2*DIM + 1
    assert F_in == 2 * DIM + 1 and w2.shape == (DIM, H)
    assert x.shape == (B, DIM) and t.shape == (B, 1)

    f32 = jnp.float32
    # The PyTorch concat, done once in the wrapper, then transposed so the
    # batch axis maps onto the 128-wide lane axis inside the kernel.
    inp_t = jnp.concatenate(
        (theta.astype(f32), x.astype(f32), t.astype(f32)), axis=-1).T   # (F_in, B)
    w1 = w1.astype(f32)
    w2 = w2.astype(f32)
    b1c = b1.astype(f32).reshape(H, 1)         # column vectors: broadcast over lanes
    b2c = b2.astype(f32).reshape(DIM, 1)

    tile_b = _choose_tile_b(B)
    grid = (pl.cdiv(B, tile_b),)

    batch_spec = lambda rows: pl.BlockSpec((rows, tile_b), lambda i: (0, i))
    const_spec = lambda shape: pl.BlockSpec(shape, lambda i: (0, 0))

    cost = pl.CostEstimate(
        flops=2 * B * (F_in * H + H * DIM),
        transcendentals=B * DIM,
        bytes_accessed=4 * (F_in * B + H * F_in + H + DIM * H + DIM + DIM * B),
    )

    out_t = pl.pallas_call(
        epsilon_net_kernel,
        out_shape=jax.ShapeDtypeStruct((DIM, B), f32),
        grid=grid,
        in_specs=[
            batch_spec(F_in),          # stacked (theta,x,t)^T — streamed over batch
            const_spec((H, F_in)),     # W1  (VMEM-resident)
            const_spec((H, 1)),        # b1  (VMEM-resident)
            const_spec((DIM, H)),      # W2  (VMEM-resident)
            const_spec((DIM, 1)),      # b2  (VMEM-resident)
        ],
        out_specs=batch_spec(DIM),     # (DIM, TILE_B): lane-dense stores
        compiler_params=pltpu.CompilerParams(
            dimension_semantics=("parallel",)),
        cost_estimate=cost,
    )(inp_t, w1, b1c, w2, b2c)

    return out_t.T                     # back to (B, DIM)


def init_params(key, dim):
    """Deterministic init mirroring torch.nn.Linear's U(-1/sqrt(fan_in), +..),
    in the PyTorch (out_features, in_features) layout."""
    fan_in1, out1 = 2 * dim + 1, 5 * dim
    fan_in2, out2 = 5 * dim, dim
    k1, k2, k3, k4 = jax.random.split(key, 4)
    lim1 = 1.0 / float(fan_in1) ** 0.5
    lim2 = 1.0 / float(fan_in2) ** 0.5
    w1 = jax.random.uniform(k1, (out1, fan_in1), jnp.float32, -lim1, lim1)
    b1 = jax.random.uniform(k2, (out1,), jnp.float32, -lim1, lim1)
    w2 = jax.random.uniform(k3, (out2, fan_in2), jnp.float32, -lim2, lim2)
    b2 = jax.random.uniform(k4, (out2,), jnp.float32, -lim2, lim2)
    return (w1, b1, w2, b2)


if __name__ == "__main__":
    DIM = 8
    B = 16

    key = jax.random.PRNGKey(0)
    k_theta, k_x, k_t, k_p = jax.random.split(key, 4)

    theta = jax.random.normal(k_theta, (B, DIM), jnp.float32)
    x = jax.random.normal(k_x, (B, DIM), jnp.float32)
    t = jax.random.uniform(k_t, (B, 1), jnp.float32)

    params = init_params(k_p, DIM)

    out = epsilon_net_forward(theta, x, t, params)
    out = jax.block_until_ready(out)

    # Reference check against plain JAX (same math as the PyTorch module).
    w1, b1, w2, b2 = params
    inp = jnp.concatenate((theta, x, t), axis=-1)
    ref = jnp.tanh(jnp.maximum(inp @ w1.T + b1, 0.0) @ w2.T + b2)
    assert out.shape == (B, DIM)
    assert jnp.allclose(out, ref, atol=1e-5), "mismatch vs reference"

    print("KERNEL_OK")
</pallas_src>

<mosaic_0001>
module attributes {stable_mosaic.version = 11 : i64} {
  func.func @epsilon_net_kernel(%arg0: i32, %arg1: memref<17x16xf32, #tpu.memory_space<vmem>>, %arg2: memref<40x17xf32, #tpu.memory_space<vmem>>, %arg3: memref<40x1xf32, #tpu.memory_space<vmem>>, %arg4: memref<8x40xf32, #tpu.memory_space<vmem>>, %arg5: memref<8x1xf32, #tpu.memory_space<vmem>>, %arg6: memref<8x16xf32, #tpu.memory_space<vmem>>) attributes {dimension_semantics = [#tpu.dimension_semantics<parallel>], iteration_bounds = array<i64: 1>, scalar_prefetch = 0 : i64, scratch_operands = 0 : i64, tpu.core_type = #tpu.core_type<tc>, window_params = [{transform_indices = @transform_0, window_bounds = array<i64: 17, 16>}, {pipeline_mode = #tpu.pipeline_mode<synchronous>, transform_indices = @transform_1, window_bounds = array<i64: 40, 17>}, {pipeline_mode = #tpu.pipeline_mode<synchronous>, transform_indices = @transform_2, window_bounds = array<i64: 40, 1>}, {pipeline_mode = #tpu.pipeline_mode<synchronous>, transform_indices = @transform_3, window_bounds = array<i64: 8, 40>}, {pipeline_mode = #tpu.pipeline_mode<synchronous>, transform_indices = @transform_4, window_bounds = array<i64: 8, 1>}, {transform_indices = @transform_5, window_bounds = array<i64: 8, 16>}]} {
    %c0 = arith.constant 0 : index
    %c0_0 = arith.constant 0 : index
    %0 = vector.load %arg2[%c0, %c0_0] : memref<40x17xf32, #tpu.memory_space<vmem>>, vector<40x17xf32>
    %c0_1 = arith.constant 0 : index
    %c0_2 = arith.constant 0 : index
    %1 = vector.load %arg1[%c0_1, %c0_2] : memref<17x16xf32, #tpu.memory_space<vmem>>, vector<17x16xf32>
    %cst = arith.constant dense<0.000000e+00> : vector<40x16xf32>
    %2 = tpu.matmul %0, %1, %cst {dimension_numbers = #tpu.dot_dimension_numbers<[1], [0], [0], [1], [0, 0, 1, 1], [], []>} : vector<40x17xf32>, vector<17x16xf32>, vector<40x16xf32> -> vector<40x16xf32>
    %c0_3 = arith.constant 0 : index
    %c0_4 = arith.constant 0 : index
    %3 = vector.load %arg3[%c0_3, %c0_4] : memref<40x1xf32, #tpu.memory_space<vmem>>, vector<40x1xf32>
    %4 = vector.broadcast %3 : vector<40x1xf32> to vector<40x16xf32>
    %5 = arith.addf %2, %4 : vector<40x16xf32>
    %cst_5 = arith.constant 0.000000e+00 : f32
    %6 = vector.broadcast %cst_5 : f32 to vector<40x16xf32>
    %7 = arith.maximumf %5, %6 : vector<40x16xf32>
    %c0_6 = arith.constant 0 : index
    %c0_7 = arith.constant 0 : index
    %8 = vector.load %arg4[%c0_6, %c0_7] : memref<8x40xf32, #tpu.memory_space<vmem>>, vector<8x40xf32>
    %cst_8 = arith.constant dense<0.000000e+00> : vector<8x16xf32>
    %9 = tpu.matmul %8, %7, %cst_8 {dimension_numbers = #tpu.dot_dimension_numbers<[1], [0], [0], [1], [0, 0, 1, 1], [], []>} : vector<8x40xf32>, vector<40x16xf32>, vector<8x16xf32> -> vector<8x16xf32>
    %c0_9 = arith.constant 0 : index
    %c0_10 = arith.constant 0 : index
    %10 = vector.load %arg5[%c0_9, %c0_10] : memref<8x1xf32, #tpu.memory_space<vmem>>, vector<8x1xf32>
    %11 = vector.broadcast %10 : vector<8x1xf32> to vector<8x16xf32>
    %12 = arith.addf %9, %11 : vector<8x16xf32>
    %13 = math.tanh %12 : vector<8x16xf32>
    %c0_11 = arith.constant 0 : index
    %c0_12 = arith.constant 0 : index
    %14 = vector.load %arg6[%c0_11, %c0_12] : memref<8x16xf32, #tpu.memory_space<vmem>>, vector<8x16xf32>
    tpu.vector_store %arg6[%c0_11, %c0_12], %13 {strides = array<i32>} : memref<8x16xf32, #tpu.memory_space<vmem>>, vector<8x16xf32>,
    return
  }
  func.func @transform_0(%arg0: i32) -> (i32, i32) {
    %c0_i32 = arith.constant 0 : i32
    %c0_i32_0 = arith.constant 0 : i32
    return %c0_i32, %arg0 : i32, i32
  }
  func.func @transform_1(%arg0: i32) -> (i32, i32) {
    %c0_i32 = arith.constant 0 : i32
    %c0_i32_0 = arith.constant 0 : i32
    %c0_i32_1 = arith.constant 0 : i32
    return %c0_i32, %c0_i32_0 : i32, i32
  }
  func.func @transform_2(%arg0: i32) -> (i32, i32) {
    %c0_i32 = arith.constant 0 : i32
    %c0_i32_0 = arith.constant 0 : i32
    %c0_i32_1 = arith.constant 0 : i32
    return %c0_i32, %c0_i32_0 : i32, i32
  }
  func.func @transform_3(%arg0: i32) -> (i32, i32) {
    %c0_i32 = arith.constant 0 : i32
    %c0_i32_0 = arith.constant 0 : i32
    %c0_i32_1 = arith.constant 0 : i32
    return %c0_i32, %c0_i32_0 : i32, i32
  }
  func.func @transform_4(%arg0: i32) -> (i32, i32) {
    %c0_i32 = arith.constant 0 : i32
    %c0_i32_0 = arith.constant 0 : i32
    %c0_i32_1 = arith.constant 0 : i32
    return %c0_i32, %c0_i32_0 : i32, i32
  }
  func.func @transform_5(%arg0: i32) -> (i32, i32) {
    %c0_i32 = arith.constant 0 : i32
    %c0_i32_0 = arith.constant 0 : i32
    return %c0_i32, %arg0 : i32, i32
  }
}

</mosaic_0001>

<llo_original>
// kernel: tpu_custom_call.1
$region0: #{tpu_custom_call.1}
  #allocation0 [shape = 'u32[]', space=smem, size = 0x4, offset = 0x4, fixed_abs, tag = 'smem constant byte address 0x4 - core index']
  #allocation1 [shape = 'u32[144,128]{1,0:T(1,128)}', space=vmem, size = 0x12000, scoped, tag = 'internal scratch']
  %s0 = inlined_call_operand.vmem [shape: f32[17,16], index: 0, kind: input, shape index: {}]
  %s1 = inlined_call_operand.vmem [shape: f32[40,17], index: 1, kind: input, shape index: {}]
  %s2 = inlined_call_operand.vmem [shape: f32[40,1], index: 2, kind: input, shape index: {}]
  %s3 = inlined_call_operand.vmem [shape: f32[8,40], index: 3, kind: input, shape index: {}]
  %s4 = inlined_call_operand.vmem [shape: f32[8,1], index: 4, kind: input, shape index: {}]
  %s5 = inlined_call_operand.hbm [shape: f32[8,16], index: 5, kind: output, shape index: {}]
  %s6 = sld [smem:[#allocation0]]
  $region30: #{tpu_custom_call.1} parent=0
    _
  %s8 = ssub.s32 1, %s6
  %s9 = scalar_select 0, %s8, %s6
  $region1: #{tpu_custom_call.1} parent=0
    #allocation2 [shape = 'u8[4096]{0}', space=vmem, size = 0x1000, scoped, tag = 'output window, operand 0, single buffered']
    #allocation3 [shape = 's32[1]{0}', space=sflag, size = 0x4, scoped, tag = 'scoped memory for tpu_custom_call.1']
    %10 = vsyncpa [#allocation3], 0
    // Predicated region
    $region2: #{tpu_custom_call.1} parent=1 // pred_check
      _
    $region3: #{tpu_custom_call.1} parent=1 // pred_check_branch
      %12 = sbr.rel (0) target = $region5
    $region4: #{tpu_custom_call.1} parent=1 // pred_region
      _
    $region5: #{tpu_custom_call.1} parent=1 // pred_fallthru
      _
    // Predicated region
    $region6: #{tpu_custom_call.1} parent=1 // pred_check
      _
    $region7: #{tpu_custom_call.1} parent=1 // pred_check_branch
      %14 = sbr.rel (0) target = $region9
    $region8: #{tpu_custom_call.1} parent=1 // pred_region
      _
    $region9: #{tpu_custom_call.1} parent=1 // pred_fallthru
      _
    // Predicated region
    $region10: #{tpu_custom_call.1} parent=1 // pred_check
      _
    $region11: #{tpu_custom_call.1} parent=1 // pred_check_branch
      %16 = sbr.rel (0) target = $region13
    $region12: #{tpu_custom_call.1} parent=1 // pred_region
      _
    $region13: #{tpu_custom_call.1} parent=1 // pred_fallthru
      _
    // Predicated region
    $region14: #{tpu_custom_call.1} parent=1 // pred_check
      _
    $region15: #{tpu_custom_call.1} parent=1 // pred_check_branch
      %18 = sbr.rel (0) target = $region17
    $region16: #{tpu_custom_call.1} parent=1 // pred_region
      _
    $region17: #{tpu_custom_call.1} parent=1 // pred_fallthru
      _
    // Predicated region
    $region18: #{tpu_custom_call.1} parent=1 // pred_check
      _
    $region19: #{tpu_custom_call.1} parent=1 // pred_check_branch
      %20 = sbr.rel (0) target = $region21
    $region20: #{tpu_custom_call.1} parent=1 // pred_region
      _
    $region21: #{tpu_custom_call.1} parent=1 // pred_fallthru
      _
    %v21 = vld [vmem:[%s1] sm:$0xff]
    %v22 = vld [vmem:[%s1 + $0x8] sm:$0xff]
    %v23 = vld [vmem:[%s1 + $0x10] sm:$0xff]
    %v24 = vld [vmem:[%s1 + $0x18] sm:$0xff]
    %v25 = vld [vmem:[%s1 + $0x20] sm:$0xff]
    %v26 = vld [vmem:[%s0] sm:$0xff]
    %v27 = vld [vmem:[%s0 + $0x8] sm:$0xff]
    %v28 = vld [vmem:[%s0 + $0x10] sm:$0x1]
    %v29 = vld [vmem:[%s2] sm:$0xff]
    %v30 = vld [vmem:[%s2 + $0x8] sm:$0xff]
    %v31 = vld [vmem:[%s2 + $0x10] sm:$0xff]
    %v32 = vld [vmem:[%s2 + $0x18] sm:$0xff]
    %v33 = vld [vmem:[%s2 + $0x20] sm:$0xff]
    %35 = vset.pattern.permute.xlu0 0
    %36 = vperm.xlu0 %35, %v29
    %v37 = vpop.permute.xlu0 %36
    %40 = vset.pattern.permute.xlu0 0
    %41 = vperm.xlu0 %40, %v30
    %v42 = vpop.permute.xlu0 %41
    %45 = vset.pattern.permute.xlu0 0
    %46 = vperm.xlu0 %45, %v31
    %v47 = vpop.permute.xlu0 %46
    %50 = vset.pattern.permute.xlu0 0
    %51 = vperm.xlu0 %50, %v32
    %v52 = vpop.permute.xlu0 %51
    %55 = vset.pattern.permute.xlu0 0
    %56 = vperm.xlu0 %55, %v33
    %v57 = vpop.permute.xlu0 %56
    %vm59 = vcmask 138240
    %v61 = vsel %vm59, %v21, 0
    %v64 = vsel %vm59, %v22, 0
    %v67 = vsel %vm59, %v23, 0
    %v70 = vsel %vm59, %v24, 0
    %v73 = vsel %vm59, %v25, 0
    %vm75 = vcmask 1040384
    %v77 = vsel %vm75, %v28, 0
    %79 = vmatprep.subr.mxu0 0.0
    %80 = vmatpush1.msra.mxu0 0.0
    %81 = vmatprep.subr.mxu0 0.0
    %82 = vmatpush1.msra.mxu0 0.0
    %83 = vmatprep.subr.mxu0 0.0
    %84 = vmatpush1.msra.mxu0 0.0
    %85 = vmatprep.subr.mxu0 0.0
    %86 = vmatpush1.msra.mxu0 0.0
    %87 = vmatprep.subr.mxu0 0.0
    %88 = vmatpush1.msra.mxu0 0.0
    %89 = vmatprep.subr.mxu0 0.0
    %90 = vmatpush1.msra.mxu0 0.0
    %91 = vmatprep.subr.mxu0 0.0
    %92 = vmatpush1.msra.mxu0 0.0
    %93 = vmatprep.subr.mxu0 0.0
    %94 = vmatpush1.msra.mxu0 0.0
    %95 = vmatprep.subr.mxu0 0.0
    %96 = vmatpush1.msra.mxu0 0.0
    %97 = vmatprep.subr.mxu0 0.0
    %98 = vmatpush1.msra.mxu0 0.0
    %99 = vmatprep.subr.mxu0 0.0
    %100 = vmatpush1.msra.mxu0 0.0
    %101 = vmatprep.subr.mxu0 0.0
    %102 = vmatpush1.msra.mxu0 0.0
    %103 = vmatprep.subr.mxu0 0.0
    %104 = vmatpush1.msra.mxu0 0.0
    %105 = vmatprep.subr.mxu0 0.0
    %106 = vmatpush1.msra.mxu0 %v77
    %107 = vmatprep.subr.mxu0 0.0
    %108 = vmatpush1.msra.mxu0 %v27
    %109 = vmatprep.subr.mxu0 0.0
    %110 = vmatpush1.msra.mxu0 %v26
    %111 = vmatprep.subr.mxu0 0.0
    %112 = vmatpush2.msra.mxu0 0.0
    %113 = vmatprep.subr.mxu0 0.0
    %114 = vmatpush2.msra.mxu0 0.0
    %115 = vmatprep.subr.mxu0 0.0
    %116 = vmatpush2.msra.mxu0 0.0
    %117 = vmatprep.subr.mxu0 0.0
    %118 = vmatpush2.msra.mxu0 0.0
    %119 = vmatprep.subr.mxu0 0.0
    %120 = vmatpush2.msra.mxu0 0.0
    %121 = vmatprep.subr.mxu0 0.0
    %122 = vmatpush2.msra.mxu0 0.0
    %123 = vmatprep.subr.mxu0 0.0
    %124 = vmatpush2.msra.mxu0 0.0
    %125 = vmatprep.subr.mxu0 0.0
    %126 = vmatpush2.msra.mxu0 0.0
    %127 = vmatprep.subr.mxu0 0.0
    %128 = vmatpush2.msra.mxu0 0.0
    %129 = vmatprep.subr.mxu0 0.0
    %130 = vmatpush2.msra.mxu0 0.0
    %131 = vmatprep.subr.mxu0 0.0
    %132 = vmatpush2.msra.mxu0 0.0
    %133 = vmatprep.subr.mxu0 0.0
    %134 = vmatpush2.msra.mxu0 0.0
    %135 = vmatprep.subr.mxu0 0.0
    %136 = vmatpush2.msra.mxu0 0.0
    %137 = vmatprep.subr.mxu0 0.0
    %138 = vmatpush2.msra.mxu0 0.0
    %139 = vmatprep.subr.mxu0 0.0
    %140 = vmatpush2.msra.mxu0 0.0
    %141 = vmatprep.subr.mxu0 0.0
    %142 = vmatpush2.msra.mxu0 0.0
    %143 = vmatprep.mubr.f32.mxu0 0.0
    %144 = vmatmul.mubr.f32.gmra.mxu0 %v61
    %v145 = vpop.f32.mrf.mxu0
    %v146 = vadd.f32 %v37, %v145
    %v147 = vpop.f32.mrf.mxu0
    %148 = vmatprep.mubr.f32.mxu0 0.0
    %149 = vmatmul.mubr.f32.gmra.mxu0 %v64
    %v150 = vpop.f32.mrf.mxu0
    %v151 = vadd.f32 %v42, %v150
    %v152 = vpop.f32.mrf.mxu0
    %153 = vmatprep.mubr.f32.mxu0 0.0
    %154 = vmatmul.mubr.f32.gmra.mxu0 %v67
    %v155 = vpop.f32.mrf.mxu0
    %v156 = vadd.f32 %v47, %v155
    %v157 = vpop.f32.mrf.mxu0
    %158 = vmatprep.mubr.f32.mxu0 0.0
    %159 = vmatmul.mubr.f32.gmra.mxu0 %v70
    %v160 = vpop.f32.mrf.mxu0
    %v161 = vadd.f32 %v52, %v160
    %v162 = vpop.f32.mrf.mxu0
    %163 = vmatprep.mubr.f32.mxu0 0.0
    %164 = vmatmul.mubr.f32.gmra.mxu0 %v73
    %v165 = vpop.f32.mrf.mxu0
    %v166 = vadd.f32 %v57, %v165
    %v167 = vpop.f32.mrf.mxu0
    %168 = vdwg.mxu0
    %v169 = vmax.f32 %v146, 0.0
    %v170 = vmax.f32 %v151, 0.0
    %v171 = vmax.f32 %v156, 0.0
    %v172 = vmax.f32 %v161, 0.0
    %v173 = vmax.f32 %v166, 0.0
    %v174 = vld [vmem:[%s3] sm:$0xff]
    %v175 = vld [vmem:[%s4] sm:$0xff]
    %177 = vset.pattern.permute.xlu0 0
    %178 = vperm.xlu0 %177, %v175
    %v179 = vpop.permute.xlu0 %178
    %vm181 = vcmask 326656
    %v183 = vsel %vm181, %v174, 0
    %185 = vmatprep.subr.mxu0 0.0
    %186 = vmatpush1.msra.mxu0 0.0
    %187 = vmatprep.subr.mxu0 0.0
    %188 = vmatpush1.msra.mxu0 0.0
    %189 = vmatprep.subr.mxu0 0.0
    %190 = vmatpush1.msra.mxu0 0.0
    %191 = vmatprep.subr.mxu0 0.0
    %192 = vmatpush1.msra.mxu0 0.0
    %193 = vmatprep.subr.mxu0 0.0
    %194 = vmatpush1.msra.mxu0 0.0
    %195 = vmatprep.subr.mxu0 0.0
    %196 = vmatpush1.msra.mxu0 0.0
    %197 = vmatprep.subr.mxu0 0.0
    %198 = vmatpush1.msra.mxu0 0.0
    %199 = vmatprep.subr.mxu0 0.0
    %200 = vmatpush1.msra.mxu0 0.0
    %201 = vmatprep.subr.mxu0 0.0
    %202 = vmatpush1.msra.mxu0 0.0
    %203 = vmatprep.subr.mxu0 0.0
    %204 = vmatpush1.msra.mxu0 0.0
    %205 = vmatprep.subr.mxu0 0.0
    %206 = vmatpush1.msra.mxu0 0.0
    %207 = vmatprep.subr.mxu0 0.0
    %208 = vmatpush1.msra.mxu0 %v173
    %209 = vmatprep.subr.mxu0 0.0
    %210 = vmatpush1.msra.mxu0 %v172
    %211 = vmatprep.subr.mxu0 0.0
    %212 = vmatpush1.msra.mxu0 %v171
    %213 = vmatprep.subr.mxu0 0.0
    %214 = vmatpush1.msra.mxu0 %v170
    %215 = vmatprep.subr.mxu0 0.0
    %216 = vmatpush1.msra.mxu0 %v169
    %217 = vmatprep.subr.mxu0 0.0
    %218 = vmatpush2.msra.mxu0 0.0
    %219 = vmatprep.subr.mxu0 0.0
    %220 = vmatpush2.msra.mxu0 0.0
    %221 = vmatprep.subr.mxu0 0.0
    %222 = vmatpush2.msra.mxu0 0.0
    %223 = vmatprep.subr.mxu0 0.0
    %224 = vmatpush2.msra.mxu0 0.0
    %225 = vmatprep.subr.mxu0 0.0
    %226 = vmatpush2.msra.mxu0 0.0
    %227 = vmatprep.subr.mxu0 0.0
    %228 = vmatpush2.msra.mxu0 0.0
    %229 = vmatprep.subr.mxu0 0.0
    %230 = vmatpush2.msra.mxu0 0.0
    %231 = vmatprep.subr.mxu0 0.0
    %232 = vmatpush2.msra.mxu0 0.0
    %233 = vmatprep.subr.mxu0 0.0
    %234 = vmatpush2.msra.mxu0 0.0
    %235 = vmatprep.subr.mxu0 0.0
    %236 = vmatpush2.msra.mxu0 0.0
    %237 = vmatprep.subr.mxu0 0.0
    %238 = vmatpush2.msra.mxu0 0.0
    %239 = vmatprep.subr.mxu0 0.0
    %240 = vmatpush2.msra.mxu0 0.0
    %241 = vmatprep.subr.mxu0 0.0
    %242 = vmatpush2.msra.mxu0 0.0
    %243 = vmatprep.subr.mxu0 0.0
    %244 = vmatpush2.msra.mxu0 0.0
    %245 = vmatprep.subr.mxu0 0.0
    %246 = vmatpush2.msra.mxu0 0.0
    %247 = vmatprep.subr.mxu0 0.0
    %248 = vmatpush2.msra.mxu0 0.0
    %249 = vmatprep.mubr.f32.mxu0 0.0
    %250 = vmatmul.mubr.f32.gmra.mxu0 %v183
    %v251 = vpop.f32.mrf.mxu0
    %v252 = vadd.f32 %v179, %v251
    %v253 = vpop.f32.mrf.mxu0
    %254 = vdwg.mxu0
    %v255 = vtanh.pop %v252
    %vm256 = vcmask 130048
    %257 = vst.msk [vmem:[#allocation2] sm:$0xff] %vm256, %v255
    // Predicated region
    $region22: #{tpu_custom_call.1} parent=1 // pred_check
      _
    $region23: #{tpu_custom_call.1} parent=1 // pred_check_branch
      %259 = sbr.rel (0) target = $region25
    $region24: #{tpu_custom_call.1} parent=1 // pred_region
      %s261 = ssub.s32 128, 128
      %262 = vsyncadd [#allocation3], %s261
      %s264 = sshll.u32 [#allocation2], 4
      %s265 = int_to_ptr.vmem [resolvable:$true] %s264
      %267 = dma.vmem_to_hbm [thread:$0]  %s265, 128, %s5, [#allocation3]
    $region25: #{tpu_custom_call.1} parent=1 // pred_fallthru
      _
    // Predicated region
    $region26: #{tpu_custom_call.1} parent=1 // pred_check
      _
    $region27: #{tpu_custom_call.1} parent=1 // pred_check_branch
      %269 = sbr.rel (0) target = $region29
    $region28: #{tpu_custom_call.1} parent=1 // pred_region
      %270 = dma.done [#allocation3], 128
    $region29: #{tpu_custom_call.1} parent=1 // pred_fallthru
      _
    %271 = vsyncpa [#allocation3], 1

</llo_original>
